<compile_context>
chip_gen: v7x
topology: tpu7x:2x2x1
jax: 0.10.0
libtpu: 0.0.40
codegen_flags: <defaults>
</compile_context>

<pallas_src>
import functools

import jax
import jax.numpy as jnp
from jax.experimental import pallas as pl
from jax.experimental.pallas import tpu as pltpu


def _leaky_activation_kernel(leaky_ref, pre_ref, prev_ref, out_ref, *, native_bf16):
    """Elementwise tanh + leaky blend on one (block_rows, block_cols) tile."""
    in_dtype = pre_ref.dtype
    if in_dtype == jnp.float32 or (native_bf16 and in_dtype == jnp.bfloat16):
        compute_dtype = in_dtype
    else:
        compute_dtype = jnp.float32          # e.g. bf16 on v5e: VPU/EUP have no bf16

    lr = leaky_ref[0].astype(compute_dtype)   # runtime scalar from SMEM (hoisted once)
    pre = pre_ref[...].astype(compute_dtype)
    prev = prev_ref[...].astype(compute_dtype)

    hx_next = jnp.tanh(pre)                   # EUP
    out = prev + lr * (hx_next - prev)        # VPU: one mul + two adds
    out_ref[...] = out.astype(out_ref.dtype)


def _round_up(x, m):
    return (x + m - 1) // m * m


def _choose_lane_width(n):
    """Widest lane-dense slab width (multiple of 128) not exceeding the data."""
    for w in (4096, 2048, 1024, 512, 256, 128):
        if n >= w:
            return w
    return 128


def _chip_kind():
    try:
        return jax.devices()[0].device_kind.lower()
    except Exception:  # pragma: no cover - defensive
        return ""


def _tile_geometry(rows, cols, itemsize, budget_bytes, min_row_steps):
    """Pick (block_rows, block_cols) from a VMEM budget: 3 refs x 2 pipeline buffers."""
    per_elem = 6 * itemsize
    col_tileable = (cols % 128 == 0) and (cols > 128)
    if col_tileable and 8 * cols * per_elem > budget_bytes:
        col_block = max(128, (budget_bytes // (8 * per_elem)) // 128 * 128)
        col_block = min(col_block, cols)
    else:
        col_block = cols                       # full-extent last dim (always legal)

    budget_rows = max(8, (budget_bytes // (col_block * per_elem)) // 8 * 8)
    block_rows = budget_rows
    if min_row_steps > 1:                      # multi-TC chip: keep >=min_row_steps steps
        block_rows = min(block_rows, _round_up(pl.cdiv(rows, min_row_steps), 8))
    block_rows = min(block_rows, _round_up(rows, 8))
    return block_rows, col_block


def leaky_activation(pre_activation, prev_state, leaky_rate, *, vmem_budget_bytes=None):
    """tanh + leaky integration:  prev + leaky_rate * (tanh(pre_activation) - prev)."""
    assert pre_activation.shape == prev_state.shape, "shape mismatch"
    assert pre_activation.dtype == prev_state.dtype, "dtype mismatch"

    orig_shape = pre_activation.shape
    dtype = pre_activation.dtype
    itemsize = jnp.dtype(dtype).itemsize
    n = pre_activation.size

    kind = _chip_kind()
    modern = ("v6" in kind) or ("v7" in kind)  # bf16-capable VPU/EUP, 32 MiB scoped VMEM
    is_v7 = "v7" in kind
    native_bf16 = modern
    if vmem_budget_bytes is None:
        vmem_budget_bytes = (24 << 20) if modern else (12 << 20)
    min_row_steps = 4 if is_v7 else 1          # keep both v7x TensorCores busy

    # ---- choose a 2-D lane-friendly view without full-array pad/slice copies ----
    padded = False
    if len(orig_shape) >= 2 and orig_shape[-1] >= 128:
        # Direct path: full-extent last dim, tile rows (ragged blocks handled by Pallas).
        cols = orig_shape[-1]
        rows = n // cols
        pre2 = pre_activation.reshape(rows, cols)
        prev2 = prev_state.reshape(rows, cols)
    else:
        # Lane-dense flatten path (hidden < 128 or 1-D input): pad only to lane_w.
        cols = _choose_lane_width(n)
        rows = pl.cdiv(n, cols)
        n_pad = rows * cols
        flat_pre = pre_activation.reshape(-1)
        flat_prev = prev_state.reshape(-1)
        if n_pad != n:
            flat_pre = jnp.pad(flat_pre, (0, n_pad - n))
            flat_prev = jnp.pad(flat_prev, (0, n_pad - n))
            padded = True
        pre2 = flat_pre.reshape(rows, cols)
        prev2 = flat_prev.reshape(rows, cols)

    block_rows, block_cols = _tile_geometry(rows, cols, itemsize,
                                            vmem_budget_bytes, min_row_steps)
    grid = (pl.cdiv(rows, block_rows), pl.cdiv(cols, block_cols))

    # Runtime scalar (SMEM via scalar prefetch) — no recompile per leaky_rate value.
    leaky = jnp.asarray(leaky_rate, dtype=jnp.float32).reshape(1)

    kernel = functools.partial(_leaky_activation_kernel, native_bf16=native_bf16)
    out2 = pl.pallas_call(
        kernel,
        out_shape=jax.ShapeDtypeStruct((rows, cols), dtype),
        grid_spec=pltpu.PrefetchScalarGridSpec(
            num_scalar_prefetch=1,
            grid=grid,
            in_specs=[
                pl.BlockSpec((block_rows, block_cols), lambda i, j, lr: (i, j)),
                pl.BlockSpec((block_rows, block_cols), lambda i, j, lr: (i, j)),
            ],
            out_specs=pl.BlockSpec((block_rows, block_cols), lambda i, j, lr: (i, j)),
        ),
        compiler_params=pltpu.CompilerParams(
            dimension_semantics=("parallel", "parallel"),
        ),
    )(leaky, pre2, prev2)

    if padded:
        return out2.reshape(-1)[:n].reshape(orig_shape)
    return out2.reshape(orig_shape)


def leaky_activation_ref(pre_activation, prev_state, leaky_rate):
    hx_next = jnp.tanh(pre_activation)
    return (1.0 - leaky_rate) * prev_state + leaky_rate * hx_next


if __name__ == "__main__":
    key = jax.random.PRNGKey(0)
    k1, k2, k3, k4, k5, k6 = jax.random.split(key, 6)
    leaky_rate = 0.3

    # Case 1: f32, hidden < 128 (lane-dense flatten path; n = 384 is a multiple
    # of 128, so no pad / no output slice is emitted).
    batch, hidden = 4, 96
    pre_f32 = jax.random.normal(k1, (batch, hidden), dtype=jnp.float32)
    prev_f32 = jax.random.normal(k2, (batch, hidden), dtype=jnp.float32)
    out_f32 = jax.block_until_ready(leaky_activation(pre_f32, prev_f32, leaky_rate))
    ref_f32 = leaky_activation_ref(pre_f32, prev_f32, leaky_rate)
    assert out_f32.shape == (batch, hidden)
    assert jnp.allclose(out_f32, ref_f32, atol=1e-5, rtol=1e-5)

    # Case 2: bf16, hidden == 128 (direct 2-D path; bf16-native compute on v6e/v7x,
    # f32 upcast on older chips).
    batch2, hidden2 = 8, 128
    pre_bf16 = jax.random.normal(k3, (batch2, hidden2), dtype=jnp.bfloat16)
    prev_bf16 = jax.random.normal(k4, (batch2, hidden2), dtype=jnp.bfloat16)
    out_bf16 = jax.block_until_ready(leaky_activation(pre_bf16, prev_bf16, leaky_rate))
    ref_bf16 = leaky_activation_ref(pre_bf16, prev_bf16, leaky_rate)
    assert out_bf16.shape == (batch2, hidden2)
    assert jnp.allclose(out_bf16.astype(jnp.float32),
                        ref_bf16.astype(jnp.float32), atol=2e-2, rtol=2e-2)

    # Case 3: f32, hidden = 160 (direct path with a full-extent, non-multiple-of-128
    # last dim and a ragged row block — exercises Pallas partial-block masking,
    # no pad / no slice).
    batch3, hidden3 = 2, 160
    pre3 = jax.random.normal(k5, (batch3, hidden3), dtype=jnp.float32)
    prev3 = jax.random.normal(k6, (batch3, hidden3), dtype=jnp.float32)
    out3 = jax.block_until_ready(leaky_activation(pre3, prev3, leaky_rate))
    ref3 = leaky_activation_ref(pre3, prev3, leaky_rate)
    assert out3.shape == (batch3, hidden3)
    assert jnp.allclose(out3, ref3, atol=1e-5, rtol=1e-5)

    print("KERNEL_OK")
</pallas_src>

<mosaic_0001>
module attributes {stable_mosaic.version = 11 : i64} {
  func.func @_leaky_activation_kernel(%arg0: i32, %arg1: i32, %arg2: memref<1xf32, #tpu.memory_space<smem>>, %arg3: memref<8x256xf32, #tpu.memory_space<vmem>>, %arg4: memref<8x256xf32, #tpu.memory_space<vmem>>, %arg5: memref<8x256xf32, #tpu.memory_space<vmem>>) attributes {dimension_semantics = [#tpu.dimension_semantics<parallel>, #tpu.dimension_semantics<parallel>], iteration_bounds = array<i64: 1, 1>, scalar_prefetch = 1 : i64, scratch_operands = 0 : i64, tpu.core_type = #tpu.core_type<tc>, window_params = [{transform_indices = @transform_0, window_bounds = array<i64: 8, 256>}, {transform_indices = @transform_1, window_bounds = array<i64: 8, 256>}, {transform_indices = @transform_2, window_bounds = array<i64: 8, 256>}]} {
    %c0 = arith.constant 0 : index
    %0 = memref.load %arg2[%c0] : memref<1xf32, #tpu.memory_space<smem>>
    %c0_0 = arith.constant 0 : index
    %c0_1 = arith.constant 0 : index
    %1 = vector.load %arg3[%c0_0, %c0_1] : memref<8x256xf32, #tpu.memory_space<vmem>>, vector<8x256xf32>
    %c0_2 = arith.constant 0 : index
    %c0_3 = arith.constant 0 : index
    %2 = vector.load %arg4[%c0_2, %c0_3] : memref<8x256xf32, #tpu.memory_space<vmem>>, vector<8x256xf32>
    %3 = math.tanh %1 : vector<8x256xf32>
    %4 = arith.subf %3, %2 : vector<8x256xf32>
    %5 = vector.broadcast %0 : f32 to vector<8x256xf32>
    %6 = arith.mulf %5, %4 : vector<8x256xf32>
    %7 = arith.addf %2, %6 : vector<8x256xf32>
    %c0_4 = arith.constant 0 : index
    %c0_5 = arith.constant 0 : index
    %8 = vector.load %arg5[%c0_4, %c0_5] : memref<8x256xf32, #tpu.memory_space<vmem>>, vector<8x256xf32>
    tpu.vector_store %arg5[%c0_4, %c0_5], %7 {strides = array<i32>} : memref<8x256xf32, #tpu.memory_space<vmem>>, vector<8x256xf32>,
    return
  }
  func.func @transform_0(%arg0: i32, %arg1: i32, %arg2: memref<1xf32, #tpu.memory_space<smem>>) -> (i32, i32) {
    %c0_i32 = arith.constant 0 : i32
    return %arg0, %arg1 : i32, i32
  }
  func.func @transform_1(%arg0: i32, %arg1: i32, %arg2: memref<1xf32, #tpu.memory_space<smem>>) -> (i32, i32) {
    %c0_i32 = arith.constant 0 : i32
    return %arg0, %arg1 : i32, i32
  }
  func.func @transform_2(%arg0: i32, %arg1: i32, %arg2: memref<1xf32, #tpu.memory_space<smem>>) -> (i32, i32) {
    %c0_i32 = arith.constant 0 : i32
    return %arg0, %arg1 : i32, i32
  }
}

</mosaic_0001>

<llo_original>
// kernel: tpu_custom_call.1
$region0: #{tpu_custom_call.1}
  #allocation0 [shape = 'u32[]', space=smem, size = 0x4, offset = 0x4, fixed_abs, tag = 'smem constant byte address 0x4 - core index']
  #allocation1 [shape = 'u32[144,128]{1,0:T(1,128)}', space=vmem, size = 0x12000, scoped, tag = 'internal scratch']
  #allocation2 [shape = 's32[1]{0}', space=sflag, size = 0x4, scoped, tag = 'scoped memory for tpu_custom_call.1']
  #allocation3 [shape = 'f32[1]{0:T(128)S(6)}', space=smem, size = 0x200, scoped, tag = 'prefetched SMEM operand 0']
  %s0 = inlined_call_operand.<no memory space> [shape: f32[1], index: 0, kind: input, shape index: {}]
  %s1 = inlined_call_operand.hbm [shape: f32[2,256], index: 1, kind: input, shape index: {}]
  %s2 = inlined_call_operand.vmem [shape: f32[2,256], index: 2, kind: input, shape index: {}]
  %s3 = inlined_call_operand.hbm [shape: f32[2,256], index: 3, kind: output, shape index: {}]
  %s4 = sld [smem:[#allocation0]]
  $region22: #{tpu_custom_call.1} parent=0
    _
  %s6 = ssub.s32 1, %s4
  %s7 = scalar_select 0, %s6, %s4
  %8 = sst [smem:[#allocation3]] %s0
  $region1: #{tpu_custom_call.1} parent=0
    #allocation4 [shape = 'u8[8192]{0}', space=vmem, size = 0x2000, scoped, tag = 'input window, operand 1, single buffered']
    #allocation5 [shape = 's32[1]{0}', space=sflag, size = 0x4, scoped, tag = 'scoped memory for tpu_custom_call.1']
    #allocation6 [shape = 's32[1]{0}', space=sflag, size = 0x4, scoped, tag = 'scoped memory for tpu_custom_call.1']
    #allocation7 [shape = 'u8[8192]{0}', space=vmem, size = 0x2000, scoped, tag = 'output window, operand 0, single buffered']
    %9 = vsyncpa [#allocation5], 0
    %10 = vsyncpa [#allocation6], 0
    // Predicated region
    $region2: #{tpu_custom_call.1} parent=1 // pred_check
      _
    $region3: #{tpu_custom_call.1} parent=1 // pred_check_branch
      %12 = sbr.rel (0) target = $region5
    $region4: #{tpu_custom_call.1} parent=1 // pred_region
      %s14 = ssub.s32 256, 64
      %15 = vsyncadd [#allocation5], %s14
      %s16 = sshll.u32 [#allocation4], 4
      %s17 = int_to_ptr.vmem [resolvable:$true] %s16
      %22 = dma.hbm_to_vmem [thread:$0]  %s1, 64, %s17, [#allocation5], 64, 64, 4
    $region5: #{tpu_custom_call.1} parent=1 // pred_fallthru
      _
    // Predicated region
    $region6: #{tpu_custom_call.1} parent=1 // pred_check
      _
    $region7: #{tpu_custom_call.1} parent=1 // pred_check_branch
      %24 = sbr.rel (0) target = $region9
    $region8: #{tpu_custom_call.1} parent=1 // pred_region
      _
    $region9: #{tpu_custom_call.1} parent=1 // pred_fallthru
      _
    // Predicated region
    $region10: #{tpu_custom_call.1} parent=1 // pred_check
      _
    $region11: #{tpu_custom_call.1} parent=1 // pred_check_branch
      %26 = sbr.rel (0) target = $region13
    $region12: #{tpu_custom_call.1} parent=1 // pred_region
      %27 = dma.done [#allocation5], 256
    $region13: #{tpu_custom_call.1} parent=1 // pred_fallthru
      _
    %s28 = sld [smem:[#allocation3]]
    %v29 = vld [vmem:[#allocation4] sm:$0xf]
    %v30 = vld [vmem:[#allocation4 + $0x4] sm:$0xf]
    %v31 = vld [vmem:[#allocation4 + $0x8] sm:$0xf]
    %v32 = vld [vmem:[#allocation4 + $0xc] sm:$0xf]
    %v33 = vld [vmem:[%s2] sm:$0xf]
    %v34 = vld [vmem:[%s2 + $0x4] sm:$0xf]
    %v35 = vld [vmem:[%s2 + $0x8] sm:$0xf]
    %v36 = vld [vmem:[%s2 + $0xc] sm:$0xf]
    %v37 = vtanh.pop %v29
    %v38 = vtanh.pop %v30
    %v39 = vtanh.pop %v31
    %v40 = vtanh.pop %v32
    %v41 = vsub.f32 %v37, %v33
    %v42 = vsub.f32 %v38, %v34
    %v43 = vsub.f32 %v39, %v35
    %v44 = vsub.f32 %v40, %v36
    %v45 = vstv %s28
    %v46 = vmul.f32 %v45, %v41
    %v47 = vmul.f32 %v45, %v42
    %v48 = vmul.f32 %v45, %v43
    %v49 = vmul.f32 %v45, %v44
    %v50 = vadd.f32 %v33, %v46
    %v51 = vadd.f32 %v34, %v47
    %v52 = vadd.f32 %v35, %v48
    %v53 = vadd.f32 %v36, %v49
    %54 = vst [vmem:[#allocation7] sm:$0xf] %v50
    %55 = vst [vmem:[#allocation7 + $0x4] sm:$0xf] %v51
    %56 = vst [vmem:[#allocation7 + $0x8] sm:$0xf] %v52
    %57 = vst [vmem:[#allocation7 + $0xc] sm:$0xf] %v53
    // Predicated region
    $region14: #{tpu_custom_call.1} parent=1 // pred_check
      _
    $region15: #{tpu_custom_call.1} parent=1 // pred_check_branch
      %59 = sbr.rel (0) target = $region17
    $region16: #{tpu_custom_call.1} parent=1 // pred_region
      %s61 = ssub.s32 256, 64
      %62 = vsyncadd [#allocation6], %s61
      %s63 = sshll.u32 [#allocation7], 4
      %s64 = int_to_ptr.vmem [resolvable:$true] %s63
      %69 = dma.vmem_to_hbm [thread:$0]  %s64, 64, %s3, [#allocation6], 64, 64, 4
    $region17: #{tpu_custom_call.1} parent=1 // pred_fallthru
      _
    // Predicated region
    $region18: #{tpu_custom_call.1} parent=1 // pred_check
      _
    $region19: #{tpu_custom_call.1} parent=1 // pred_check_branch
      %71 = sbr.rel (0) target = $region21
    $region20: #{tpu_custom_call.1} parent=1 // pred_region
      %72 = dma.done [#allocation6], 256
    $region21: #{tpu_custom_call.1} parent=1 // pred_fallthru
      _
    %73 = vsyncpa [#allocation5], 1
    %74 = vsyncpa [#allocation6], 1

</llo_original>
